<compile_context>
chip_gen: v6e
topology: v6e:2x2x1
jax: 0.10.0
libtpu: 0.0.40
codegen_flags: <defaults>
</compile_context>

<pallas_src>
import functools

import jax
import jax.numpy as jnp
from jax.experimental import pallas as pl
from jax.experimental.pallas import tpu as pltpu

IN_FEATURES = 784
OUT_FEATURES = 10

_LANE = 128
_MAX_VMEM_LIMIT = 40 * 1024 * 1024  # safe under v7x's 64 MiB physical VMEM/TC


def _round_up(x, m):
    return ((x + m - 1) // m) * m


def _linear_kernel(x_ref, w_ref, b_ref, o_ref, *, compute_dtype):
    # x: [TB, 784], w: [784, 10] (pre-transposed), b: [1, 10] -> o: [TB, 10]
    x = x_ref[...]
    if compute_dtype is not None and x.dtype != compute_dtype:
        x = x.astype(compute_dtype)          # in-register cast, no extra HBM pass
    acc = jnp.dot(x, w_ref[...], preferred_element_type=jnp.float32)  # MXU, f32 acc
    o_ref[...] = (acc + b_ref[...]).astype(o_ref.dtype)


def _vmem_need_bytes(tb, x_itemsize, w_itemsize, out_itemsize):
    # Lane-padded VMEM footprint: x / out are double-buffered by Pallas.
    x_buf = tb * _round_up(IN_FEATURES, _LANE) * x_itemsize
    o_buf = tb * _LANE * out_itemsize
    w_buf = _round_up(IN_FEATURES, 8) * _LANE * w_itemsize
    b_buf = 8 * _LANE * 4
    return 2 * x_buf + 2 * o_buf + w_buf + b_buf


def minist_logistic_forward(xb, weight, bias, *, block_b=2048,
                            use_bf16_matmul=True):
    """Forward pass of Minist_Logistic (nn.Linear(784, 10)).

    xb:     [B, 784] float32 or bfloat16
    weight: [10, 784] float32 (PyTorch nn.Linear convention)
    bias:   [10]      float32
    returns [B, 10]   (promoted dtype of xb/weight; f32 for the usual case)
    """
    B = xb.shape[0]
    out_dtype = jnp.result_type(xb.dtype, weight.dtype)

    compute_dtype = jnp.bfloat16 if use_bf16_matmul else None
    w_t = weight.T                              # [784, 10], one-time, tiny
    if compute_dtype is not None:
        w_t = w_t.astype(compute_dtype)         # ~31 KB cast, negligible
    b2 = bias.reshape(1, OUT_FEATURES).astype(jnp.float32)

    # --- batch-tile selection -------------------------------------------------
    x_itemsize = jnp.dtype(xb.dtype).itemsize
    sub = max(8, 32 // x_itemsize)              # sublane multiple (8 f32 / 16 bf16)
    tb = _round_up(min(block_b, max(B, 1)), sub)
    # Prefer >=2 grid tiles so the "parallel" batch axis can be split across
    # TensorCores (v7x megacore) when the batch allows it.
    if pl.cdiv(B, tb) < 2 and B > sub:
        tb = _round_up(pl.cdiv(B, 2), sub)
    # Shrink the tile if it would overflow the VMEM budget.
    w_itemsize = jnp.dtype(w_t.dtype).itemsize
    out_itemsize = jnp.dtype(out_dtype).itemsize
    while tb > sub and _vmem_need_bytes(tb, x_itemsize, w_itemsize,
                                        out_itemsize) > _MAX_VMEM_LIMIT:
        tb = max(sub, _round_up(tb // 2, sub))

    need = _vmem_need_bytes(tb, x_itemsize, w_itemsize, out_itemsize)
    vmem_limit = int(min(max(need + (2 << 20), 16 << 20), _MAX_VMEM_LIMIT))

    grid = (pl.cdiv(B, tb),)                    # no jnp.pad: tail block masked

    kernel = functools.partial(_linear_kernel, compute_dtype=compute_dtype)

    return pl.pallas_call(
        kernel,
        out_shape=jax.ShapeDtypeStruct((B, OUT_FEATURES), out_dtype),
        grid_spec=pl.GridSpec(
            grid=grid,
            in_specs=[
                # x: one batch tile per grid step (double-buffered by Pallas).
                pl.BlockSpec((tb, IN_FEATURES), lambda i: (i, 0)),
                # W^T [784, 10]: VMEM-resident across all steps.
                pl.BlockSpec((IN_FEATURES, OUT_FEATURES), lambda i: (0, 0)),
                # bias: VMEM-resident.
                pl.BlockSpec((1, OUT_FEATURES), lambda i: (0, 0)),
            ],
            # Keep the (tb, 10) out block: full last dim, contiguous HBM slab;
            # padding N to 128 lanes would only add write traffic here.
            out_specs=pl.BlockSpec((tb, OUT_FEATURES), lambda i: (i, 0)),
        ),
        compiler_params=pltpu.CompilerParams(
            dimension_semantics=("parallel",),
            vmem_limit_bytes=vmem_limit,
        ),
    )(xb, w_t, b2)


if __name__ == "__main__":
    key = jax.random.PRNGKey(0)
    k_x, k_w, k_b = jax.random.split(key, 3)

    # Deterministic synthetic parameters (shapes from nn.Linear(784, 10)).
    bound = 1.0 / (IN_FEATURES ** 0.5)
    weight = jax.random.uniform(
        k_w, (OUT_FEATURES, IN_FEATURES), jnp.float32, -bound, bound)
    bias = jax.random.uniform(
        k_b, (OUT_FEATURES,), jnp.float32, -bound, bound)

    # Case 1: bs=64 (as in the original script), exact-f32 path, small tile so
    # the pipelined grid has 2 steps.
    B1 = 64
    xb1 = jax.random.normal(k_x, (B1, IN_FEATURES), jnp.float32)
    ref1 = xb1 @ weight.T + bias
    out1 = jax.block_until_ready(
        minist_logistic_forward(xb1, weight, bias, block_b=32,
                                use_bf16_matmul=False))
    assert out1.shape == (B1, OUT_FEATURES)
    assert jnp.allclose(out1, ref1, atol=1e-4, rtol=1e-4)

    # Case 2: ragged batch (B not a multiple of the tile) — exercises the
    # no-pad cdiv grid with masked tail writes, plus the default bf16-operand
    # matmul and default tile selection.
    B2 = 50
    xb2 = jax.random.normal(jax.random.PRNGKey(1), (B2, IN_FEATURES),
                            jnp.float32)
    ref2 = xb2 @ weight.T + bias
    out2 = jax.block_until_ready(minist_logistic_forward(xb2, weight, bias))
    assert out2.shape == (B2, OUT_FEATURES)
    assert jnp.allclose(out2, ref2, atol=2e-2, rtol=2e-2)

    # Case 3: bf16 activations end-to-end (halves HBM read traffic); f32
    # accumulation keeps the result close to the f32 reference.
    xb3 = xb1.astype(jnp.bfloat16)
    out3 = jax.block_until_ready(minist_logistic_forward(xb3, weight, bias))
    assert out3.shape == (B1, OUT_FEATURES)
    assert out3.dtype == jnp.float32
    assert jnp.allclose(out3, ref1, atol=2e-2, rtol=2e-2)

    print("KERNEL_OK")
</pallas_src>

<mosaic_0001>
module attributes {stable_mosaic.version = 11 : i64} {
  func.func @_linear_kernel(%arg0: i32, %arg1: memref<32x784xf32, #tpu.memory_space<vmem>>, %arg2: memref<784x10xf32, #tpu.memory_space<vmem>>, %arg3: memref<1x10xf32, #tpu.memory_space<vmem>>, %arg4: memref<32x10xf32, #tpu.memory_space<vmem>>) attributes {dimension_semantics = [#tpu.dimension_semantics<parallel>], iteration_bounds = array<i64: 2>, scalar_prefetch = 0 : i64, scratch_operands = 0 : i64, tpu.core_type = #tpu.core_type<tc>, window_params = [{transform_indices = @transform_0, window_bounds = array<i64: 32, 784>}, {pipeline_mode = #tpu.pipeline_mode<synchronous>, transform_indices = @transform_1, window_bounds = array<i64: 784, 10>}, {pipeline_mode = #tpu.pipeline_mode<synchronous>, transform_indices = @transform_2, window_bounds = array<i64: 1, 10>}, {transform_indices = @transform_3, window_bounds = array<i64: 32, 10>}]} {
    %c0 = arith.constant 0 : index
    %c0_0 = arith.constant 0 : index
    %0 = vector.load %arg1[%c0, %c0_0] : memref<32x784xf32, #tpu.memory_space<vmem>>, vector<32x784xf32>
    %c0_1 = arith.constant 0 : index
    %c0_2 = arith.constant 0 : index
    %1 = vector.load %arg2[%c0_1, %c0_2] : memref<784x10xf32, #tpu.memory_space<vmem>>, vector<784x10xf32>
    %cst = arith.constant dense<0.000000e+00> : vector<32x10xf32>
    %2 = tpu.matmul %0, %1, %cst {dimension_numbers = #tpu.dot_dimension_numbers<[1], [0], [0], [1], [0, 0, 1, 1], [], []>} : vector<32x784xf32>, vector<784x10xf32>, vector<32x10xf32> -> vector<32x10xf32>
    %c0_3 = arith.constant 0 : index
    %c0_4 = arith.constant 0 : index
    %3 = vector.load %arg3[%c0_3, %c0_4] : memref<1x10xf32, #tpu.memory_space<vmem>>, vector<1x10xf32>
    %4 = vector.broadcast %3 : vector<1x10xf32> to vector<32x10xf32>
    %5 = arith.addf %2, %4 : vector<32x10xf32>
    %c0_5 = arith.constant 0 : index
    %c0_6 = arith.constant 0 : index
    %6 = vector.load %arg4[%c0_5, %c0_6] : memref<32x10xf32, #tpu.memory_space<vmem>>, vector<32x10xf32>
    tpu.vector_store %arg4[%c0_5, %c0_6], %5 {strides = array<i32>} : memref<32x10xf32, #tpu.memory_space<vmem>>, vector<32x10xf32>,
    return
  }
  func.func @transform_0(%arg0: i32) -> (i32, i32) {
    %c0_i32 = arith.constant 0 : i32
    %c0_i32_0 = arith.constant 0 : i32
    return %arg0, %c0_i32 : i32, i32
  }
  func.func @transform_1(%arg0: i32) -> (i32, i32) {
    %c0_i32 = arith.constant 0 : i32
    %c0_i32_0 = arith.constant 0 : i32
    %c0_i32_1 = arith.constant 0 : i32
    return %c0_i32, %c0_i32_0 : i32, i32
  }
  func.func @transform_2(%arg0: i32) -> (i32, i32) {
    %c0_i32 = arith.constant 0 : i32
    %c0_i32_0 = arith.constant 0 : i32
    %c0_i32_1 = arith.constant 0 : i32
    return %c0_i32, %c0_i32_0 : i32, i32
  }
  func.func @transform_3(%arg0: i32) -> (i32, i32) {
    %c0_i32 = arith.constant 0 : i32
    %c0_i32_0 = arith.constant 0 : i32
    return %arg0, %c0_i32 : i32, i32
  }
}

</mosaic_0001>

<llo_original>
// kernel: tpu_custom_call.1
$region0: #{tpu_custom_call.1}
  #allocation0 [shape = 'u32[]', space=smem, size = 0x4, offset = 0x4, fixed_abs, tag = 'smem constant byte address 0x4 - core index']
  #allocation1 [shape = 'u32[144,128]{1,0:T(1,128)}', space=vmem, size = 0x12000, scoped, tag = 'internal scratch']
  %s0 = inlined_call_operand.vmem [shape: f32[64,784], index: 0, kind: input, shape index: {}]
  %s1 = inlined_call_operand.vmem [shape: f32[784,10], index: 1, kind: input, shape index: {}]
  %s2 = inlined_call_operand.vmem [shape: f32[1,10], index: 2, kind: input, shape index: {}]
  %s3 = inlined_call_operand.vmem [shape: f32[64,10], index: 3, kind: output, shape index: {}]
  %s4 = sld [smem:[#allocation0]]
  $region45: #{tpu_custom_call.1} parent=0
    _
  %s6 = ssub.s32 1, %s4
  %s7 = scalar_select 0, %s6, %s4
  loop: start=0, step=1, limit=4
  $region2: #{tpu_custom_call.1} parent=0 // loop_pre_header
    _
  $region3: #{tpu_custom_call.1} parent=0 // loop_header
    %s9 = sphi 0, %s13
    %p10 = scmp.ge.s32.totalorder %s9, 4
    %s19 = sphi 0, %s21
    %s22 = sphi 0, %s19
    %s23 = sphi 0, %s22
    %s39 = sphi 0, %s23
    %s43 = sphi 0, %s43
    %s45 = sphi 0, %s43
    %s46 = sphi 0, %s45
    %s60 = sphi 0, %s46
    %s64 = sphi 0, %s64
    %s66 = sphi 0, %s64
    %s67 = sphi 0, %s66
    %s81 = sphi 0, %s67
    %s87 = sphi 0, %s89
    %s90 = sphi 0, %s87
    %s91 = sphi 0, %s90
    %s107 = sphi 0, %s91
  $region4: #{tpu_custom_call.1} parent=0 // loop_header_branch
    %12 = sbr.rel (%p10) target = $region8
  $region5: #{tpu_custom_call.1} parent=0 // loop_body
    %s14 = ssub.s32 %s9, 1
    %s15 = ssub.s32 %s9, 2
    %s16 = sadd.s32 %s9, 1
    %s17 = ssub.s32 %s9, %s16
    %p18 = scmp.eq.s32.totalorder %s17, 0
    %s20 = sadd.s32 %s19, 1
    %s21 = scalar_select %p18, %s19, %s20
    %p24 = pneg %p18
    %p25 = scmp.eq.s32.totalorder %s9, 1
    %p26 = por %p24, %p25
    %p27 = scmp.ne.s32.totalorder %s19, %s22
    %p28 = scmp.eq.s32.totalorder %s9, 0
    %p29 = por %p27, %p28
    %p30 = scmp.ne.s32.totalorder %s19, %s22
    %p31 = scmp.eq.s32.totalorder %s14, 1
    %p32 = por %p30, %p31
    %p33 = scmp.ne.s32.totalorder %s22, %s23
    %p34 = scmp.eq.s32.totalorder %s14, 0
    %p35 = por %p33, %p34
    %p36 = scmp.ne.s32.totalorder %s22, %s23
    %p37 = scmp.eq.s32.totalorder %s15, 1
    %p38 = por %p36, %p37
    %p40 = scmp.ne.s32.totalorder %s23, %s39
    %p41 = scmp.eq.s32.totalorder %s15, 0
    %p42 = por %p40, %p41
    %s44 = sadd.s32 %s43, 1
    %p47 = scmp.eq.s32.totalorder %s9, 1
    %p48 = scmp.ne.s32.totalorder %s43, %s45
    %p49 = scmp.eq.s32.totalorder %s9, 0
    %p50 = por %p48, %p49
    %p51 = scmp.ne.s32.totalorder %s43, %s45
    %p52 = scmp.eq.s32.totalorder %s14, 1
    %p53 = por %p51, %p52
    %p54 = scmp.ne.s32.totalorder %s45, %s46
    %p55 = scmp.eq.s32.totalorder %s14, 0
    %p56 = por %p54, %p55
    %p57 = scmp.ne.s32.totalorder %s45, %s46
    %p58 = scmp.eq.s32.totalorder %s15, 1
    %p59 = por %p57, %p58
    %p61 = scmp.ne.s32.totalorder %s46, %s60
    %p62 = scmp.eq.s32.totalorder %s15, 0
    %p63 = por %p61, %p62
    %s65 = sadd.s32 %s64, 1
    %p68 = scmp.eq.s32.totalorder %s9, 1
    %p69 = scmp.ne.s32.totalorder %s64, %s66
    %p70 = scmp.eq.s32.totalorder %s9, 0
    %p71 = por %p69, %p70
    %p72 = scmp.ne.s32.totalorder %s64, %s66
    %p73 = scmp.eq.s32.totalorder %s14, 1
    %p74 = por %p72, %p73
    %p75 = scmp.ne.s32.totalorder %s66, %s67
    %p76 = scmp.eq.s32.totalorder %s14, 0
    %p77 = por %p75, %p76
    %p78 = scmp.ne.s32.totalorder %s66, %s67
    %p79 = scmp.eq.s32.totalorder %s15, 1
    %p80 = por %p78, %p79
    %p82 = scmp.ne.s32.totalorder %s67, %s81
    %p83 = scmp.eq.s32.totalorder %s15, 0
    %p84 = por %p82, %p83
    %s85 = ssub.s32 %s9, %s16
    %p86 = scmp.eq.s32.totalorder %s85, 0
    %s88 = sadd.s32 %s87, 1
    %s89 = scalar_select %p86, %s87, %s88
    %p92 = pneg %p86
    %p93 = scmp.eq.s32.totalorder %s9, 1
    %p94 = por %p92, %p93
    %p95 = scmp.ne.s32.totalorder %s87, %s90
    %p96 = scmp.eq.s32.totalorder %s9, 0
    %p97 = por %p95, %p96
    %p98 = scmp.ne.s32.totalorder %s87, %s90
    %p99 = scmp.eq.s32.totalorder %s14, 1
    %p100 = por %p98, %p99
    %p101 = scmp.ne.s32.totalorder %s90, %s91
    %p102 = scmp.eq.s32.totalorder %s14, 0
    %p103 = por %p101, %p102
    %p104 = scmp.ne.s32.totalorder %s90, %s91
    %p105 = scmp.eq.s32.totalorder %s15, 1
    %p106 = por %p104, %p105
    %p108 = scmp.ne.s32.totalorder %s91, %s107
    %p109 = scmp.eq.s32.totalorder %s15, 0
    %p110 = por %p108, %p109
    %p111 = scmp.le.s32.totalorder 1, %s9
    %p112 = scmp.lt.s32.totalorder %s9, 3
    %p113 = pnand %p111, %p112
    %p114 = pneg %p113
    // Predicated region
    $region9: #{tpu_custom_call.1} parent=5 // pred_check
      _
    $region10: #{tpu_custom_call.1} parent=5 // pred_check_branch
      %116 = sbr.rel (%p113) target = $region12
    $region11: #{tpu_custom_call.1} parent=5 // pred_region
      %s117 = ssub.s32 %s9, 1
      // Predicated region
      $region13: #{tpu_custom_call.1} parent=11 // pred_check
        %p118 = pneg %p56
      $region14: #{tpu_custom_call.1} parent=11 // pred_check_branch
        %120 = sbr.rel (%p118) target = $region16
      $region15: #{tpu_custom_call.1} parent=11 // pred_region
        _
      $region16: #{tpu_custom_call.1} parent=11 // pred_fallthru
        _
      // Predicated region
      $region17: #{tpu_custom_call.1} parent=11 // pred_check
        %p121 = pneg %p77
      $region18: #{tpu_custom_call.1} parent=11 // pred_check_branch
        %123 = sbr.rel (%p121) target = $region20
      $region19: #{tpu_custom_call.1} parent=11 // pred_region
        _
      $region20: #{tpu_custom_call.1} parent=11 // pred_fallthru
        _
    $region12: #{tpu_custom_call.1} parent=5 // pred_fallthru
      _
    %p124 = scmp.lt.s32.totalorder %s9, 2
    // Predicated region
    $region21: #{tpu_custom_call.1} parent=5 // pred_check
      %p125 = pneg %p124
    $region22: #{tpu_custom_call.1} parent=5 // pred_check_branch
      %127 = sbr.rel (%p125) target = $region24
    $region23: #{tpu_custom_call.1} parent=5 // pred_region
      // Predicated region
      $region25: #{tpu_custom_call.1} parent=23 // pred_check
        %p128 = pneg %p29
      $region26: #{tpu_custom_call.1} parent=23 // pred_check_branch
        %130 = sbr.rel (%p128) target = $region28
      $region27: #{tpu_custom_call.1} parent=23 // pred_region
        %s131 = smul.u32 4, %s9
        %p132 = scmp.lt.s32.totalorder %s131, 7
        %s133 = scalar_select %p132, %s131, 7
        %s134 = smul.addr %s133, 7
        %s135 = smul.addr %s134, 8
        %s136 = scalar_lea.vmem %s0, %s135
        %s137 = smul.u32 4, %s9
      $region28: #{tpu_custom_call.1} parent=23 // pred_fallthru
        _
    $region24: #{tpu_custom_call.1} parent=5 // pred_fallthru
      _
    %p138 = scmp.le.s32.totalorder 1, %s9
    %p139 = scmp.lt.s32.totalorder %s9, 3
    %p140 = pnand %p138, %p139
    %p141 = pneg %p140
    // Predicated region
    $region29: #{tpu_custom_call.1} parent=5 // pred_check
      _
    $region30: #{tpu_custom_call.1} parent=5 // pred_check_branch
      %143 = sbr.rel (%p140) target = $region32
    $region31: #{tpu_custom_call.1} parent=5 // pred_region
      %s144 = ssub.s32 %s9, 1
      %s145 = smul.u32 4, %s14
      %p146 = scmp.lt.s32.totalorder %s145, 7
      %s147 = scalar_select %p146, %s145, 7
      %s148 = smul.addr %s147, 7
      %s149 = smul.addr %s148, 8
      %s150 = scalar_lea.vmem %s0, %s149
      %p151 = pneg %p35
      %p152 = pneg %p32
      %p153 = pneg %p56
      %p154 = pneg %p53
      %p155 = pneg %p77
      %p156 = pneg %p74
      %p157 = pneg %p103
      %p158 = pneg %p100
      %s159 = smul.u32 4, %s14
      %p160 = scmp.lt.s32.totalorder %s159, 7
      %s161 = scalar_select %p160, %s159, 7
      %s162 = smul.addr %s161, 8
      %s163 = scalar_lea.vmem %s3, %s162
      %s164 = smul.u32 4, %s14
      %p165 = scmp.lt.s32.totalorder %s164, 7
      %s166 = scalar_select %p165, %s164, 7
      %s167 = smul.addr %s166, 7
      %s168 = smul.addr %s167, 8
      %s169 = scalar_lea.vmem %s0, %s168
      %s170 = smul.u32 4, %s14
      %s171 = smul.u32 4, %s14
      %p172 = scmp.lt.s32.totalorder %s171, 7
      %s173 = scalar_select %p172, %s171, 7
      %s174 = smul.addr %s173, 8
      %s175 = scalar_lea.vmem %s3, %s174
      %s176 = smul.u32 4, %s14
      %v177 = vld [vmem:[%s169] sm:$0xff]
      %v178 = vld [vmem:[%s169 + $0x8] sm:$0xff]
      %v179 = vld [vmem:[%s169 + $0x10] sm:$0xff]
      %v180 = vld [vmem:[%s169 + $0x18] sm:$0xff]
      %v181 = vld [vmem:[%s169 + $0x20] sm:$0xff]
      %v182 = vld [vmem:[%s169 + $0x28] sm:$0xff]
      %v183 = vld [vmem:[%s169 + $0x30] sm:$0xff]
      %v184 = vld [vmem:[%s169 + $0x38] sm:$0xff]
      %v185 = vld [vmem:[%s169 + $0x40] sm:$0xff]
      %v186 = vld [vmem:[%s169 + $0x48] sm:$0xff]
      %v187 = vld [vmem:[%s169 + $0x50] sm:$0xff]
      %v188 = vld [vmem:[%s169 + $0x58] sm:$0xff]
      %v189 = vld [vmem:[%s169 + $0x60] sm:$0xff]
      %v190 = vld [vmem:[%s169 + $0x68] sm:$0xff]
      %v191 = vld [vmem:[%s169 + $0x70] sm:$0xff]
      %v192 = vld [vmem:[%s169 + $0x78] sm:$0xff]
      %v193 = vld [vmem:[%s169 + $0x80] sm:$0xff]
      %v194 = vld [vmem:[%s169 + $0x88] sm:$0xff]
      %v195 = vld [vmem:[%s169 + $0x90] sm:$0xff]
      %v196 = vld [vmem:[%s169 + $0x98] sm:$0xff]
      %v197 = vld [vmem:[%s169 + $0xa0] sm:$0xff]
      %v198 = vld [vmem:[%s169 + $0xa8] sm:$0xff]
      %v199 = vld [vmem:[%s169 + $0xb0] sm:$0xff]
      %v200 = vld [vmem:[%s169 + $0xb8] sm:$0xff]
      %v201 = vld [vmem:[%s169 + $0xc0] sm:$0xff]
      %v202 = vld [vmem:[%s169 + $0xc8] sm:$0xff]
      %v203 = vld [vmem:[%s169 + $0xd0] sm:$0xff]
      %v204 = vld [vmem:[%s169 + $0xd8] sm:$0xff]
      %v205 = vld [vmem:[%s1] sm:$0xff]
      %v206 = vld [vmem:[%s1 + $0x8] sm:$0xff]
      %v207 = vld [vmem:[%s1 + $0x10] sm:$0xff]
      %v208 = vld [vmem:[%s1 + $0x18] sm:$0xff]
      %v209 = vld [vmem:[%s1 + $0x20] sm:$0xff]
      %v210 = vld [vmem:[%s1 + $0x28] sm:$0xff]
      %v211 = vld [vmem:[%s1 + $0x30] sm:$0xff]
      %v212 = vld [vmem:[%s1 + $0x38] sm:$0xff]
      %v213 = vld [vmem:[%s1 + $0x40] sm:$0xff]
      %v214 = vld [vmem:[%s1 + $0x48] sm:$0xff]
      %v215 = vld [vmem:[%s1 + $0x50] sm:$0xff]
      %v216 = vld [vmem:[%s1 + $0x58] sm:$0xff]
      %v217 = vld [vmem:[%s1 + $0x60] sm:$0xff]
      %v218 = vld [vmem:[%s1 + $0x68] sm:$0xff]
      %v219 = vld [vmem:[%s1 + $0x70] sm:$0xff]
      %v220 = vld [vmem:[%s1 + $0x78] sm:$0xff]
      %v221 = vld [vmem:[%s1 + $0x80] sm:$0xff]
      %v222 = vld [vmem:[%s1 + $0x88] sm:$0xff]
      %v223 = vld [vmem:[%s1 + $0x90] sm:$0xff]
      %v224 = vld [vmem:[%s1 + $0x98] sm:$0xff]
      %v225 = vld [vmem:[%s1 + $0xa0] sm:$0xff]
      %v226 = vld [vmem:[%s1 + $0xa8] sm:$0xff]
      %v227 = vld [vmem:[%s1 + $0xb0] sm:$0xff]
      %v228 = vld [vmem:[%s1 + $0xb8] sm:$0xff]
      %v229 = vld [vmem:[%s1 + $0xc0] sm:$0xff]
      %v230 = vld [vmem:[%s1 + $0xc8] sm:$0xff]
      %v231 = vld [vmem:[%s1 + $0xd0] sm:$0xff]
      %v232 = vld [vmem:[%s1 + $0xd8] sm:$0xff]
      %v233 = vld [vmem:[%s1 + $0xe0] sm:$0xff]
      %v234 = vld [vmem:[%s1 + $0xe8] sm:$0xff]
      %v235 = vld [vmem:[%s1 + $0xf0] sm:$0xff]
      %v236 = vld [vmem:[%s1 + $0xf8] sm:$0xff]
      %v237 = vld [vmem:[%s1 + $0x100] sm:$0xff]
      %v238 = vld [vmem:[%s1 + $0x108] sm:$0xff]
      %v239 = vld [vmem:[%s1 + $0x110] sm:$0xff]
      %v240 = vld [vmem:[%s1 + $0x118] sm:$0xff]
      %v241 = vld [vmem:[%s1 + $0x120] sm:$0xff]
      %v242 = vld [vmem:[%s1 + $0x128] sm:$0xff]
      %v243 = vld [vmem:[%s1 + $0x130] sm:$0xff]
      %v244 = vld [vmem:[%s1 + $0x138] sm:$0xff]
      %v245 = vld [vmem:[%s1 + $0x140] sm:$0xff]
      %v246 = vld [vmem:[%s1 + $0x148] sm:$0xff]
      %v247 = vld [vmem:[%s1 + $0x150] sm:$0xff]
      %v248 = vld [vmem:[%s1 + $0x158] sm:$0xff]
      %v249 = vld [vmem:[%s1 + $0x160] sm:$0xff]
      %v250 = vld [vmem:[%s1 + $0x168] sm:$0xff]
      %v251 = vld [vmem:[%s1 + $0x170] sm:$0xff]
      %v252 = vld [vmem:[%s1 + $0x178] sm:$0xff]
      %v253 = vld [vmem:[%s1 + $0x180] sm:$0xff]
      %v254 = vld [vmem:[%s1 + $0x188] sm:$0xff]
      %v255 = vld [vmem:[%s1 + $0x190] sm:$0xff]
      %v256 = vld [vmem:[%s1 + $0x198] sm:$0xff]
      %v257 = vld [vmem:[%s1 + $0x1a0] sm:$0xff]
      %v258 = vld [vmem:[%s1 + $0x1a8] sm:$0xff]
      %v259 = vld [vmem:[%s1 + $0x1b0] sm:$0xff]
      %v260 = vld [vmem:[%s1 + $0x1b8] sm:$0xff]
      %v261 = vld [vmem:[%s1 + $0x1c0] sm:$0xff]
      %v262 = vld [vmem:[%s1 + $0x1c8] sm:$0xff]
      %v263 = vld [vmem:[%s1 + $0x1d0] sm:$0xff]
      %v264 = vld [vmem:[%s1 + $0x1d8] sm:$0xff]
      %v265 = vld [vmem:[%s1 + $0x1e0] sm:$0xff]
      %v266 = vld [vmem:[%s1 + $0x1e8] sm:$0xff]
      %v267 = vld [vmem:[%s1 + $0x1f0] sm:$0xff]
      %v268 = vld [vmem:[%s1 + $0x1f8] sm:$0xff]
      %v269 = vld [vmem:[%s1 + $0x200] sm:$0xff]
      %v270 = vld [vmem:[%s1 + $0x208] sm:$0xff]
      %v271 = vld [vmem:[%s1 + $0x210] sm:$0xff]
      %v272 = vld [vmem:[%s1 + $0x218] sm:$0xff]
      %v273 = vld [vmem:[%s1 + $0x220] sm:$0xff]
      %v274 = vld [vmem:[%s1 + $0x228] sm:$0xff]
      %v275 = vld [vmem:[%s1 + $0x230] sm:$0xff]
      %v276 = vld [vmem:[%s1 + $0x238] sm:$0xff]
      %v277 = vld [vmem:[%s1 + $0x240] sm:$0xff]
      %v278 = vld [vmem:[%s1 + $0x248] sm:$0xff]
      %v279 = vld [vmem:[%s1 + $0x250] sm:$0xff]
      %v280 = vld [vmem:[%s1 + $0x258] sm:$0xff]
      %v281 = vld [vmem:[%s1 + $0x260] sm:$0xff]
      %v282 = vld [vmem:[%s1 + $0x268] sm:$0xff]
      %v283 = vld [vmem:[%s1 + $0x270] sm:$0xff]
      %v284 = vld [vmem:[%s1 + $0x278] sm:$0xff]
      %v285 = vld [vmem:[%s1 + $0x280] sm:$0xff]
      %v286 = vld [vmem:[%s1 + $0x288] sm:$0xff]
      %v287 = vld [vmem:[%s1 + $0x290] sm:$0xff]
      %v288 = vld [vmem:[%s1 + $0x298] sm:$0xff]
      %v289 = vld [vmem:[%s1 + $0x2a0] sm:$0xff]
      %v290 = vld [vmem:[%s1 + $0x2a8] sm:$0xff]
      %v291 = vld [vmem:[%s1 + $0x2b0] sm:$0xff]
      %v292 = vld [vmem:[%s1 + $0x2b8] sm:$0xff]
      %v293 = vld [vmem:[%s1 + $0x2c0] sm:$0xff]
      %v294 = vld [vmem:[%s1 + $0x2c8] sm:$0xff]
      %v295 = vld [vmem:[%s1 + $0x2d0] sm:$0xff]
      %v296 = vld [vmem:[%s1 + $0x2d8] sm:$0xff]
      %v297 = vld [vmem:[%s1 + $0x2e0] sm:$0xff]
      %v298 = vld [vmem:[%s1 + $0x2e8] sm:$0xff]
      %v299 = vld [vmem:[%s1 + $0x2f0] sm:$0xff]
      %v300 = vld [vmem:[%s1 + $0x2f8] sm:$0xff]
      %v301 = vld [vmem:[%s1 + $0x300] sm:$0xff]
      %v302 = vld [vmem:[%s1 + $0x308] sm:$0xff]
      %v303 = vld [vmem:[%s2] sm:$0x1]
      %v305 = vlaneseq
      %v306 = vshrl.u32 %v305, 7
      %v307 = vsub.s32 0, %v306
      %v308 = vrot.slane %v303, %v307
      %vm310 = vcmask 130048
      %v312 = vsel %vm310, %v183, 0
      %v315 = vsel %vm310, %v190, 0
      %v318 = vsel %vm310, %v197, 0
      %v321 = vsel %vm310, %v204, 0
      %323 = vmatprep.subr.mxu0 0.0
      %324 = vmatpush1.msra.mxu0 %v220
      %325 = vmatprep.subr.mxu0 0.0
      %326 = vmatpush1.msra.mxu0 %v219
      %327 = vmatprep.subr.mxu0 0.0
      %328 = vmatpush1.msra.mxu0 %v218
      %329 = vmatprep.subr.mxu0 0.0
      %330 = vmatpush1.msra.mxu0 %v217
      %331 = vmatprep.subr.mxu0 0.0
      %332 = vmatpush1.msra.mxu0 %v216
      %333 = vmatprep.subr.mxu0 0.0
      %334 = vmatpush1.msra.mxu0 %v215
      %335 = vmatprep.subr.mxu0 0.0
      %336 = vmatpush1.msra.mxu0 %v214
      %337 = vmatprep.subr.mxu0 0.0
      %338 = vmatpush1.msra.mxu0 %v213
      %339 = vmatprep.subr.mxu0 0.0
      %340 = vmatpush1.msra.mxu0 %v212
      %341 = vmatprep.subr.mxu0 0.0
      %342 = vmatpush1.msra.mxu0 %v211
      %343 = vmatprep.subr.mxu0 0.0
      %344 = vmatpush1.msra.mxu0 %v210
      %345 = vmatprep.subr.mxu0 0.0
      %346 = vmatpush1.msra.mxu0 %v209
      %347 = vmatprep.subr.mxu0 0.0
      %348 = vmatpush1.msra.mxu0 %v208
      %349 = vmatprep.subr.mxu0 0.0
      %350 = vmatpush1.msra.mxu0 %v207
      %351 = vmatprep.subr.mxu0 0.0
      %352 = vmatpush1.msra.mxu0 %v206
      %353 = vmatprep.subr.mxu0 0.0
      %354 = vmatpush1.msra.mxu0 %v205
      %355 = vmatprep.subr.mxu0 0.0
      %356 = vmatpush2.msra.mxu0 %v236
      %357 = vmatprep.subr.mxu0 0.0
      %358 = vmatpush2.msra.mxu0 %v235
      %359 = vmatprep.subr.mxu0 0.0
      %360 = vmatpush2.msra.mxu0 %v234
      %361 = vmatprep.subr.mxu0 0.0
      %362 = vmatpush2.msra.mxu0 %v233
      %363 = vmatprep.subr.mxu0 0.0
      %364 = vmatpush2.msra.mxu0 %v232
      %365 = vmatprep.subr.mxu0 0.0
      %366 = vmatpush2.msra.mxu0 %v231
      %367 = vmatprep.subr.mxu0 0.0
      %368 = vmatpush2.msra.mxu0 %v230
      %369 = vmatprep.subr.mxu0 0.0
      %370 = vmatpush2.msra.mxu0 %v229
      %371 = vmatprep.subr.mxu0 0.0
      %372 = vmatpush2.msra.mxu0 %v228
      %373 = vmatprep.subr.mxu0 0.0
      %374 = vmatpush2.msra.mxu0 %v227
      %375 = vmatprep.subr.mxu0 0.0
      %376 = vmatpush2.msra.mxu0 %v226
      %377 = vmatprep.subr.mxu0 0.0
      %378 = vmatpush2.msra.mxu0 %v225
      %379 = vmatprep.subr.mxu0 0.0
      %380 = vmatpush2.msra.mxu0 %v224
      %381 = vmatprep.subr.mxu0 0.0
      %382 = vmatpush2.msra.mxu0 %v223
      %383 = vmatprep.subr.mxu0 0.0
      %384 = vmatpush2.msra.mxu0 %v222
      %385 = vmatprep.subr.mxu0 0.0
      %386 = vmatpush2.msra.mxu0 %v221
      %387 = vmatprep.mubr.f32.mxu0 %v178
      %388 = vmatmul.mubr.f32.gmra.mxu0 %v177
      %v389 = vpop.f32.mrf.mxu0
      %v390 = vadd.f32 %v308, %v389
      %v391 = vpop.f32.mrf.mxu0
      %392 = vmatprep.mubr.f32.mxu0 %v185
      %393 = vmatmul.mubr.f32.gmra.mxu0 %v184
      %v394 = vpop.f32.mrf.mxu0
      %v395 = vadd.f32 %v308, %v394
      %v396 = vpop.f32.mrf.mxu0
      %397 = vmatprep.mubr.f32.mxu0 %v192
      %398 = vmatmul.mubr.f32.gmra.mxu0 %v191
      %v399 = vpop.f32.mrf.mxu0
      %v400 = vadd.f32 %v308, %v399
      %v401 = vpop.f32.mrf.mxu0
      %402 = vmatprep.mubr.f32.mxu0 %v199
      %403 = vmatmul.mubr.f32.gmra.mxu0 %v198
      %v404 = vpop.f32.mrf.mxu0
      %v405 = vadd.f32 %v308, %v404
      %v406 = vpop.f32.mrf.mxu0
      %407 = vdwg.mxu0
      %408 = vmatprep.subr.mxu0 0.0
      %409 = vmatpush1.msra.mxu0 %v252
      %410 = vmatprep.subr.mxu0 0.0
      %411 = vmatpush1.msra.mxu0 %v251
      %412 = vmatprep.subr.mxu0 0.0
      %413 = vmatpush1.msra.mxu0 %v250
      %414 = vmatprep.subr.mxu0 0.0
      %415 = vmatpush1.msra.mxu0 %v249
      %416 = vmatprep.subr.mxu0 0.0
      %417 = vmatpush1.msra.mxu0 %v248
      %418 = vmatprep.subr.mxu0 0.0
      %419 = vmatpush1.msra.mxu0 %v247
      %420 = vmatprep.subr.mxu0 0.0
      %421 = vmatpush1.msra.mxu0 %v246
      %422 = vmatprep.subr.mxu0 0.0
      %423 = vmatpush1.msra.mxu0 %v245
      %424 = vmatprep.subr.mxu0 0.0
      %425 = vmatpush1.msra.mxu0 %v244
      %426 = vmatprep.subr.mxu0 0.0
      %427 = vmatpush1.msra.mxu0 %v243
      %428 = vmatprep.subr.mxu0 0.0
      %429 = vmatpush1.msra.mxu0 %v242
      %430 = vmatprep.subr.mxu0 0.0
      %431 = vmatpush1.msra.mxu0 %v241
      %432 = vmatprep.subr.mxu0 0.0
      %433 = vmatpush1.msra.mxu0 %v240
      %434 = vmatprep.subr.mxu0 0.0
      %435 = vmatpush1.msra.mxu0 %v239
      %436 = vmatprep.subr.mxu0 0.0
      %437 = vmatpush1.msra.mxu0 %v238
      %438 = vmatprep.subr.mxu0 0.0
      %439 = vmatpush1.msra.mxu0 %v237
      %440 = vmatprep.subr.mxu0 0.0
      %441 = vmatpush2.msra.mxu0 %v268
      %442 = vmatprep.subr.mxu0 0.0
      %443 = vmatpush2.msra.mxu0 %v267
      %444 = vmatprep.subr.mxu0 0.0
      %445 = vmatpush2.msra.mxu0 %v266
      %446 = vmatprep.subr.mxu0 0.0
      %447 = vmatpush2.msra.mxu0 %v265
      %448 = vmatprep.subr.mxu0 0.0
      %449 = vmatpush2.msra.mxu0 %v264
      %450 = vmatprep.subr.mxu0 0.0
      %451 = vmatpush2.msra.mxu0 %v263
      %452 = vmatprep.subr.mxu0 0.0
      %453 = vmatpush2.msra.mxu0 %v262
      %454 = vmatprep.subr.mxu0 0.0
      %455 = vmatpush2.msra.mxu0 %v261
      %456 = vmatprep.subr.mxu0 0.0
      %457 = vmatpush2.msra.mxu0 %v260
      %458 = vmatprep.subr.mxu0 0.0
      %459 = vmatpush2.msra.mxu0 %v259
      %460 = vmatprep.subr.mxu0 0.0
      %461 = vmatpush2.msra.mxu0 %v258
      %462 = vmatprep.subr.mxu0 0.0
      %463 = vmatpush2.msra.mxu0 %v257
      %464 = vmatprep.subr.mxu0 0.0
      %465 = vmatpush2.msra.mxu0 %v256
      %466 = vmatprep.subr.mxu0 0.0
      %467 = vmatpush2.msra.mxu0 %v255
      %468 = vmatprep.subr.mxu0 0.0
      %469 = vmatpush2.msra.mxu0 %v254
      %470 = vmatprep.subr.mxu0 0.0
      %471 = vmatpush2.msra.mxu0 %v253
      %472 = vmatprep.mubr.f32.mxu0 %v180
      %473 = vmatmul.mubr.f32.gmra.mxu0 %v179
      %v474 = vpop.f32.mrf.mxu0
      %v475 = vadd.f32 %v390, %v474
      %v476 = vpop.f32.mrf.mxu0
      %477 = vmatprep.mubr.f32.mxu0 %v187
      %478 = vmatmul.mubr.f32.gmra.mxu0 %v186
      %v479 = vpop.f32.mrf.mxu0
      %v480 = vadd.f32 %v395, %v479
      %v481 = vpop.f32.mrf.mxu0
      %482 = vmatprep.mubr.f32.mxu0 %v194
      %483 = vmatmul.mubr.f32.gmra.mxu0 %v193
      %v484 = vpop.f32.mrf.mxu0
      %v485 = vadd.f32 %v400, %v484
      %v486 = vpop.f32.mrf.mxu0
      %487 = vmatprep.mubr.f32.mxu0 %v201
      %488 = vmatmul.mubr.f32.gmra.mxu0 %v200
      %v489 = vpop.f32.mrf.mxu0
      %v490 = vadd.f32 %v405, %v489
      %v491 = vpop.f32.mrf.mxu0
      %492 = vdwg.mxu0
      %493 = vmatprep.subr.mxu0 0.0
      %494 = vmatpush1.msra.mxu0 %v284
      %495 = vmatprep.subr.mxu0 0.0
      %496 = vmatpush1.msra.mxu0 %v283
      %497 = vmatprep.subr.mxu0 0.0
      %498 = vmatpush1.msra.mxu0 %v282
      %499 = vmatprep.subr.mxu0 0.0
      %500 = vmatpush1.msra.mxu0 %v281
      %501 = vmatprep.subr.mxu0 0.0
      %502 = vmatpush1.msra.mxu0 %v280
      %503 = vmatprep.subr.mxu0 0.0
      %504 = vmatpush1.msra.mxu0 %v279
      %505 = vmatprep.subr.mxu0 0.0
      %506 = vmatpush1.msra.mxu0 %v278
      %507 = vmatprep.subr.mxu0 0.0
      %508 = vmatpush1.msra.mxu0 %v277
      %509 = vmatprep.subr.mxu0 0.0
      %510 = vmatpush1.msra.mxu0 %v276
      %511 = vmatprep.subr.mxu0 0.0
      %512 = vmatpush1.msra.mxu0 %v275
      %513 = vmatprep.subr.mxu0 0.0
      %514 = vmatpush1.msra.mxu0 %v274
      %515 = vmatprep.subr.mxu0 0.0
      %516 = vmatpush1.msra.mxu0 %v273
      %517 = vmatprep.subr.mxu0 0.0
      %518 = vmatpush1.msra.mxu0 %v272
      %519 = vmatprep.subr.mxu0 0.0
      %520 = vmatpush1.msra.mxu0 %v271
      %521 = vmatprep.subr.mxu0 0.0
      %522 = vmatpush1.msra.mxu0 %v270
      %523 = vmatprep.subr.mxu0 0.0
      %524 = vmatpush1.msra.mxu0 %v269
      %525 = vmatprep.subr.mxu0 0.0
      %526 = vmatpush2.msra.mxu0 %v300
      %527 = vmatprep.subr.mxu0 0.0
      %528 = vmatpush2.msra.mxu0 %v299
      %529 = vmatprep.subr.mxu0 0.0
      %530 = vmatpush2.msra.mxu0 %v298
      %531 = vmatprep.subr.mxu0 0.0
      %532 = vmatpush2.msra.mxu0 %v297
      %533 = vmatprep.subr.mxu0 0.0
      %534 = vmatpush2.msra.mxu0 %v296
      %535 = vmatprep.subr.mxu0 0.0
      %536 = vmatpush2.msra.mxu0 %v295
      %537 = vmatprep.subr.mxu0 0.0
      %538 = vmatpush2.msra.mxu0 %v294
      %539 = vmatprep.subr.mxu0 0.0
      %540 = vmatpush2.msra.mxu0 %v293
      %541 = vmatprep.subr.mxu0 0.0
      %542 = vmatpush2.msra.mxu0 %v292
      %543 = vmatprep.subr.mxu0 0.0
      %544 = vmatpush2.msra.mxu0 %v291
      %545 = vmatprep.subr.mxu0 0.0
      %546 = vmatpush2.msra.mxu0 %v290
      %547 = vmatprep.subr.mxu0 0.0
      %548 = vmatpush2.msra.mxu0 %v289
      %549 = vmatprep.subr.mxu0 0.0
      %550 = vmatpush2.msra.mxu0 %v288
      %551 = vmatprep.subr.mxu0 0.0
      %552 = vmatpush2.msra.mxu0 %v287
      %553 = vmatprep.subr.mxu0 0.0
      %554 = vmatpush2.msra.mxu0 %v286
      %555 = vmatprep.subr.mxu0 0.0
      %556 = vmatpush2.msra.mxu0 %v285
      %557 = vmatprep.mubr.f32.mxu0 %v182
      %558 = vmatmul.mubr.f32.gmra.mxu0 %v181
      %v559 = vpop.f32.mrf.mxu0
      %v560 = vadd.f32 %v475, %v559
      %v561 = vpop.f32.mrf.mxu0
      %562 = vmatprep.mubr.f32.mxu0 %v189
      %563 = vmatmul.mubr.f32.gmra.mxu0 %v188
      %v564 = vpop.f32.mrf.mxu0
      %v565 = vadd.f32 %v480, %v564
      %v566 = vpop.f32.mrf.mxu0
      %567 = vmatprep.mubr.f32.mxu0 %v196
      %568 = vmatmul.mubr.f32.gmra.mxu0 %v195
      %v569 = vpop.f32.mrf.mxu0
      %v570 = vadd.f32 %v485, %v569
      %v571 = vpop.f32.mrf.mxu0
      %572 = vmatprep.mubr.f32.mxu0 %v203
      %573 = vmatmul.mubr.f32.gmra.mxu0 %v202
      %v574 = vpop.f32.mrf.mxu0
      %v575 = vadd.f32 %v490, %v574
      %v576 = vpop.f32.mrf.mxu0
      %577 = vdwg.mxu0
      %578 = vmatprep.subr.mxu0 0.0
      %579 = vmatpush1.msra.mxu0 0.0
      %580 = vmatprep.subr.mxu0 0.0
      %581 = vmatpush1.msra.mxu0 0.0
      %582 = vmatprep.subr.mxu0 0.0
      %583 = vmatpush1.msra.mxu0 0.0
      %584 = vmatprep.subr.mxu0 0.0
      %585 = vmatpush1.msra.mxu0 0.0
      %586 = vmatprep.subr.mxu0 0.0
      %587 = vmatpush1.msra.mxu0 0.0
      %588 = vmatprep.subr.mxu0 0.0
      %589 = vmatpush1.msra.mxu0 0.0
      %590 = vmatprep.subr.mxu0 0.0
      %591 = vmatpush1.msra.mxu0 0.0
      %592 = vmatprep.subr.mxu0 0.0
      %593 = vmatpush1.msra.mxu0 0.0
      %594 = vmatprep.subr.mxu0 0.0
      %595 = vmatpush1.msra.mxu0 0.0
      %596 = vmatprep.subr.mxu0 0.0
      %597 = vmatpush1.msra.mxu0 0.0
      %598 = vmatprep.subr.mxu0 0.0
      %599 = vmatpush1.msra.mxu0 0.0
      %600 = vmatprep.subr.mxu0 0.0
      %601 = vmatpush1.msra.mxu0 0.0
      %602 = vmatprep.subr.mxu0 0.0
      %603 = vmatpush1.msra.mxu0 0.0
      %604 = vmatprep.subr.mxu0 0.0
      %605 = vmatpush1.msra.mxu0 0.0
      %606 = vmatprep.subr.mxu0 0.0
      %607 = vmatpush1.msra.mxu0 %v302
      %608 = vmatprep.subr.mxu0 0.0
      %609 = vmatpush1.msra.mxu0 %v301
      %610 = vmatprep.subr.mxu0 0.0
      %611 = vmatpush2.msra.mxu0 0.0
      %612 = vmatprep.subr.mxu0 0.0
      %613 = vmatpush2.msra.mxu0 0.0
      %614 = vmatprep.subr.mxu0 0.0
      %615 = vmatpush2.msra.mxu0 0.0
      %616 = vmatprep.subr.mxu0 0.0
      %617 = vmatpush2.msra.mxu0 0.0
      %618 = vmatprep.subr.mxu0 0.0
      %619 = vmatpush2.msra.mxu0 0.0
      %620 = vmatprep.subr.mxu0 0.0
      %621 = vmatpush2.msra.mxu0 0.0
      %622 = vmatprep.subr.mxu0 0.0
      %623 = vmatpush2.msra.mxu0 0.0
      %624 = vmatprep.subr.mxu0 0.0
      %625 = vmatpush2.msra.mxu0 0.0
      %626 = vmatprep.subr.mxu0 0.0
      %627 = vmatpush2.msra.mxu0 0.0
      %628 = vmatprep.subr.mxu0 0.0
      %629 = vmatpush2.msra.mxu0 0.0
      %630 = vmatprep.subr.mxu0 0.0
      %631 = vmatpush2.msra.mxu0 0.0
      %632 = vmatprep.subr.mxu0 0.0
      %633 = vmatpush2.msra.mxu0 0.0
      %634 = vmatprep.subr.mxu0 0.0
      %635 = vmatpush2.msra.mxu0 0.0
      %636 = vmatprep.subr.mxu0 0.0
      %637 = vmatpush2.msra.mxu0 0.0
      %638 = vmatprep.subr.mxu0 0.0
      %639 = vmatpush2.msra.mxu0 0.0
      %640 = vmatprep.subr.mxu0 0.0
      %641 = vmatpush2.msra.mxu0 0.0
      %642 = vmatprep.mubr.f32.mxu0 0.0
      %643 = vmatmul.mubr.f32.gmra.mxu0 %v312
      %v644 = vpop.f32.mrf.mxu0
      %v645 = vadd.f32 %v560, %v644
      %v646 = vpop.f32.mrf.mxu0
      %647 = vmatprep.mubr.f32.mxu0 0.0
      %648 = vmatmul.mubr.f32.gmra.mxu0 %v315
      %v649 = vpop.f32.mrf.mxu0
      %v650 = vadd.f32 %v565, %v649
      %v651 = vpop.f32.mrf.mxu0
      %652 = vmatprep.mubr.f32.mxu0 0.0
      %653 = vmatmul.mubr.f32.gmra.mxu0 %v318
      %v654 = vpop.f32.mrf.mxu0
      %v655 = vadd.f32 %v570, %v654
      %v656 = vpop.f32.mrf.mxu0
      %657 = vmatprep.mubr.f32.mxu0 0.0
      %658 = vmatmul.mubr.f32.gmra.mxu0 %v321
      %v659 = vpop.f32.mrf.mxu0
      %v660 = vadd.f32 %v575, %v659
      %v661 = vpop.f32.mrf.mxu0
      %662 = vdwg.mxu0
      %vm663 = vcmask 80896
      %664 = vst.msk [vmem:[%s175] sm:$0xff] %vm663, %v645
      %665 = vst.msk [vmem:[%s175 + $0x8] sm:$0xff] %vm663, %v650
      %666 = vst.msk [vmem:[%s175 + $0x10] sm:$0xff] %vm663, %v655
      %667 = vst.msk [vmem:[%s175 + $0x18] sm:$0xff] %vm663, %v660
      %s668 = smul.u32 4, %s14
      %p669 = scmp.lt.s32.totalorder %s668, 7
      %s670 = scalar_select %p669, %s668, 7
      %s671 = smul.addr %s670, 8
      %s672 = scalar_lea.vmem %s3, %s671
      // Predicated region
      $region33: #{tpu_custom_call.1} parent=31 // pred_check
        %p673 = pneg %p100
      $region34: #{tpu_custom_call.1} parent=31 // pred_check_branch
        %675 = sbr.rel (%p673) target = $region36
      $region35: #{tpu_custom_call.1} parent=31 // pred_region
        %s676 = smul.u32 4, %s14
      $region36: #{tpu_custom_call.1} parent=31 // pred_fallthru
        _
    $region32: #{tpu_custom_call.1} parent=5 // pred_fallthru
      _
    %p677 = scmp.le.s32.totalorder 2, %s9
    // Predicated region
    $region37: #{tpu_custom_call.1} parent=5 // pred_check
      %p678 = pneg %p677
    $region38: #{tpu_custom_call.1} parent=5 // pred_check_branch
      %680 = sbr.rel (%p678) target = $region40
    $region39: #{tpu_custom_call.1} parent=5 // pred_region
      %s681 = ssub.s32 %s9, 2
      // Predicated region
      $region41: #{tpu_custom_call.1} parent=39 // pred_check
        %p682 = pneg %p106
      $region42: #{tpu_custom_call.1} parent=39 // pred_check_branch
        %684 = sbr.rel (%p682) target = $region44
      $region43: #{tpu_custom_call.1} parent=39 // pred_region
        %s685 = smul.u32 4, %s15
        %p686 = scmp.lt.s32.totalorder %s685, 7
        %s687 = scalar_select %p686, %s685, 7
        %s688 = smul.addr %s687, 8
        %s689 = scalar_lea.vmem %s3, %s688
      $region44: #{tpu_custom_call.1} parent=39 // pred_fallthru
        _
    $region40: #{tpu_custom_call.1} parent=5 // pred_fallthru
      _
  $region6: #{tpu_custom_call.1} parent=0 // loop_footer
    %s13 = sadd.s32 1, %s9
  $region7: #{tpu_custom_call.1} parent=0 // loop_footer_branch
    %8 = sbr.rel target = $region3
  $region8: #{tpu_custom_call.1} parent=0 // loop_exit
    _

</llo_original>
